<compile_context>
chip_gen: v7x
topology: tpu7x:2x2x1
jax: 0.10.0
libtpu: 0.0.40
codegen_flags: <defaults>
</compile_context>

<pallas_src>
import math

import jax
import jax.numpy as jnp
from jax.experimental import pallas as pl
from jax.experimental.pallas import tpu as pltpu

_SQRT_2_OVER_PI = math.sqrt(2.0 / math.pi)


def _gelu_tanh(x):
    # PyTorch nn.GELU(approximate='tanh'):
    # 0.5 * x * (1 + tanh( sqrt(2/pi) * (x + 0.044715 * x^3) ))
    return 0.5 * x * (1.0 + jnp.tanh(_SQRT_2_OVER_PI * (x + 0.044715 * x * x * x)))


def _round_up(v, m):
    return ((v + m - 1) // m) * m


# ----------------------------- kernels --------------------------------------

def _mlp_kernel_resident(x_ref, wfc_ref, bfc_ref, wproj_ref, bproj_ref, o_ref):
    """Weights resident in VMEM (constant index_map); grid = (row tiles,).

    x_ref:     (tm, C)  compute dtype
    wfc_ref:   (C, H)   full c_fc weight
    bfc_ref:   (1, H)   f32
    wproj_ref: (H, C)   full c_proj weight
    bproj_ref: (1, C)   f32
    o_ref:     (tm, C)  output dtype
    """
    h = jnp.dot(x_ref[...], wfc_ref[...], preferred_element_type=jnp.float32)
    h = h + bfc_ref[...].astype(jnp.float32)
    g = _gelu_tanh(h)
    g = g.astype(wproj_ref.dtype)
    out = jnp.dot(g, wproj_ref[...], preferred_element_type=jnp.float32)
    out = out + bproj_ref[...].astype(jnp.float32)
    o_ref[...] = out.astype(o_ref.dtype)


def _make_mlp_kernel_tiled(th):
    """Hidden dim tiled on the trailing (reduction) grid axis.

    Grid = (row tiles, hidden tiles); f32 (tm, C) accumulator scratch lives
    across the hidden axis; c_proj bias folded into its init.
    """

    def kernel(x_ref, wfc_ref, bfc_ref, wproj_ref, bproj_ref, o_ref, acc_ref):
        h_idx = pl.program_id(1)

        @pl.when(h_idx == 0)
        def _init():
            acc_ref[...] = jnp.broadcast_to(
                bproj_ref[...].astype(jnp.float32), acc_ref.shape)

        # First GEMM: native compute dtype straight to the MXU, f32 accumulate.
        h = jnp.dot(x_ref[...], wfc_ref[...], preferred_element_type=jnp.float32)
        # b_fc is a single resident (1, H) block: slice the current hidden tile.
        start = pl.multiple_of(h_idx * th, th)
        h = h + bfc_ref[:, pl.ds(start, th)].astype(jnp.float32)
        g = _gelu_tanh(h)
        g = g.astype(wproj_ref.dtype)
        acc_ref[...] += jnp.dot(g, wproj_ref[...],
                                preferred_element_type=jnp.float32)

        @pl.when(h_idx == pl.num_programs(1) - 1)
        def _finalize():
            o_ref[...] = acc_ref[...].astype(o_ref.dtype)

    return kernel


# ----------------------------- wrapper ---------------------------------------

def mlp_forward(x, w_fc, b_fc, w_proj, b_proj, *, compute_dtype=jnp.bfloat16):
    """x: [B, T, C]; weights stored as (in, out); biases 1-D."""
    B, T, C = x.shape
    H = w_fc.shape[1]  # 4 * C
    assert C % 128 == 0, "n_embd must be a multiple of 128 for lane-dense tiles"
    assert H % 128 == 0, "hidden dim must be a multiple of 128"

    out_dtype = x.dtype
    cd = jnp.dtype(compute_dtype) if compute_dtype is not None else jnp.dtype(x.dtype)
    cd_bytes = cd.itemsize
    out_bytes = jnp.dtype(out_dtype).itemsize

    # Generation-aware VMEM budget (v5e/v6e: 128 MiB, v7x: 64 MiB per TC).
    try:
        info = pltpu.get_tpu_info()
        vmem_cap = int(getattr(info, "vmem_capacity_bytes", 64 * 1024 * 1024))
    except Exception:  # interpret mode / unknown chip -> conservative
        vmem_cap = 64 * 1024 * 1024
    vmem_cap = max(vmem_cap, 32 * 1024 * 1024)
    vmem_budget = min((vmem_cap * 3) // 4, 100 * 1024 * 1024)

    # dtype-aware sublane rounding: 8 rows for f32, 16 for bf16, 32 for int8/fp8.
    sub = max(8, 32 // cd_bytes)
    M = B * T
    m_cap = _round_up(M, sub)

    tm_base = [1024, 512, 256, 128, 64, 32, 16, 8]
    tm_cands = [c for c in tm_base if c % sub == 0 and c <= m_cap]
    if m_cap <= 1024 and m_cap not in tm_cands:
        tm_cands.append(m_cap)   # tight tile for small / oddly sized M
    tm_cands = sorted(set(tm_cands), reverse=True)

    bias_vmem = 2 * 8 * (H + C) * 4  # (1, H)/(1, C) f32 blocks, sublane-padded

    def resident_vmem(tm):
        return (2 * tm * C * cd_bytes            # x tiles (double buffered)
                + 2 * 2 * C * H * cd_bytes       # w_fc + w_proj (conservative 2x)
                + bias_vmem
                + 2 * tm * C * out_bytes         # out tiles
                + 2 * tm * H * 4                 # h / g f32 intermediates
                + tm * C * 4)                    # headroom

    def tiled_vmem(tm, th):
        return (2 * tm * C * cd_bytes
                + 2 * C * th * cd_bytes          # w_fc H-tile
                + 2 * th * C * cd_bytes          # w_proj H-tile
                + bias_vmem
                + 2 * tm * C * out_bytes
                + tm * C * 4                     # f32 accumulator scratch
                + 2 * tm * th * 4)               # h / g intermediates

    tm = None
    th = None
    resident = False
    # Path A: weights resident in VMEM (preferred whenever they fit).
    for cand in tm_cands:
        if resident_vmem(cand) <= vmem_budget:
            tm, resident = cand, True
            break
    if not resident:
        # Path B: hidden-tiled fallback; spend VMEM on tm before th.
        th_base = [1024, 512, 256, 128]
        th_cands = [t for t in th_base if t <= H and H % t == 0] or [128]
        for c_tm in tm_cands:
            for c_th in th_cands:
                if tiled_vmem(c_tm, c_th) <= vmem_budget:
                    tm, th = c_tm, c_th
                    break
            if tm is not None:
                break
        if tm is None:  # last resort: smallest config
            tm, th = tm_cands[-1], th_cands[-1]

    M_pad = _round_up(M, tm)
    n_m = M_pad // tm

    x2d = x.reshape(M, C).astype(cd)
    if M_pad != M:
        x2d = jnp.pad(x2d, ((0, M_pad - M), (0, 0)))
    w_fc_c = w_fc.astype(cd)
    w_proj_c = w_proj.astype(cd)
    b_fc2 = b_fc.reshape(1, H).astype(jnp.float32)
    b_proj2 = b_proj.reshape(1, C).astype(jnp.float32)

    weight_bytes_once = ((w_fc_c.size + w_proj_c.size) * cd_bytes
                         + (b_fc2.size + b_proj2.size) * 4)

    if resident:
        kernel = _mlp_kernel_resident
        grid_spec = pltpu.PrefetchScalarGridSpec(
            num_scalar_prefetch=0,
            grid=(n_m,),
            in_specs=[
                pl.BlockSpec((tm, C), lambda i: (i, 0)),   # x row tile
                pl.BlockSpec((C, H), lambda i: (0, 0)),    # w_fc (resident)
                pl.BlockSpec((1, H), lambda i: (0, 0)),    # b_fc (resident)
                pl.BlockSpec((H, C), lambda i: (0, 0)),    # w_proj (resident)
                pl.BlockSpec((1, C), lambda i: (0, 0)),    # b_proj (resident)
            ],
            out_specs=pl.BlockSpec((tm, C), lambda i: (i, 0)),
            scratch_shapes=[],
        )
        dim_sem = ("parallel",)
        bytes_accessed = (x2d.size * cd_bytes + weight_bytes_once
                          + M_pad * C * out_bytes)
    else:
        n_h = H // th
        kernel = _make_mlp_kernel_tiled(th)
        grid_spec = pltpu.PrefetchScalarGridSpec(
            num_scalar_prefetch=0,
            grid=(n_m, n_h),                               # reduction axis last
            in_specs=[
                pl.BlockSpec((tm, C), lambda i, h: (i, 0)),  # x row tile
                pl.BlockSpec((C, th), lambda i, h: (0, h)),  # w_fc H-tile
                pl.BlockSpec((1, H), lambda i, h: (0, 0)),   # b_fc (once/row tile)
                pl.BlockSpec((th, C), lambda i, h: (h, 0)),  # w_proj H-tile
                pl.BlockSpec((1, C), lambda i, h: (0, 0)),   # b_proj
            ],
            out_specs=pl.BlockSpec((tm, C), lambda i, h: (i, 0)),
            scratch_shapes=[pltpu.VMEM((tm, C), jnp.float32)],
        )
        dim_sem = ("parallel", "arbitrary")
        bytes_accessed = (x2d.size * cd_bytes + n_m * weight_bytes_once
                          + M_pad * C * out_bytes)

    cost = pl.CostEstimate(
        flops=4 * M_pad * C * H,          # two GEMMs
        transcendentals=M_pad * H,        # tanh per hidden element
        bytes_accessed=int(bytes_accessed),
    )

    out2d = pl.pallas_call(
        kernel,
        out_shape=jax.ShapeDtypeStruct((M_pad, C), out_dtype),
        grid_spec=grid_spec,
        compiler_params=pltpu.CompilerParams(
            dimension_semantics=dim_sem,
            vmem_limit_bytes=int(vmem_budget),
        ),
        cost_estimate=cost,
    )(x2d, w_fc_c, b_fc2, w_proj_c, b_proj2)

    if M_pad != M:
        out2d = out2d[:M]
    return out2d.reshape(B, T, C)


def reference_mlp(x, w_fc, b_fc, w_proj, b_proj, compute_dtype=None):
    """Pure-JAX reference mirroring the kernel's numeric path."""
    cd = jnp.dtype(compute_dtype) if compute_dtype is not None else x.dtype
    h = jnp.einsum("btc,ch->bth", x.astype(cd), w_fc.astype(cd),
                   preferred_element_type=jnp.float32) + b_fc.astype(jnp.float32)
    g = _gelu_tanh(h)
    out = jnp.einsum("bth,hc->btc", g.astype(cd), w_proj.astype(cd),
                     preferred_element_type=jnp.float32) + b_proj.astype(jnp.float32)
    return out.astype(x.dtype)


if __name__ == "__main__":
    # Small config: batch=2, seq=8, n_embd=128 (lane-dense) -> hidden = 512.
    B, T, C = 2, 8, 128
    H = 4 * C

    key = jax.random.PRNGKey(0)
    kx, k1, k2, k3, k4 = jax.random.split(key, 5)

    x = jax.random.normal(kx, (B, T, C), dtype=jnp.float32)
    # Deterministic init (shapes match nn.Linear params, stored as (in, out)).
    w_fc = jax.random.normal(k1, (C, H), dtype=jnp.float32) * 0.02
    b_fc = jax.random.normal(k2, (H,), dtype=jnp.float32) * 0.02
    w_proj = jax.random.normal(k3, (H, C), dtype=jnp.float32) * 0.02
    b_proj = jax.random.normal(k4, (C,), dtype=jnp.float32) * 0.02

    out = mlp_forward(x, w_fc, b_fc, w_proj, b_proj)
    out = jax.block_until_ready(out)

    ref = reference_mlp(x, w_fc, b_fc, w_proj, b_proj,
                        compute_dtype=jnp.bfloat16)
    assert out.shape == (B, T, C)
    assert out.dtype == x.dtype
    max_err = float(jnp.max(jnp.abs(out - ref)))
    assert jnp.allclose(out, ref, atol=1e-2, rtol=1e-2), (
        f"mismatch vs reference, max abs err = {max_err}")

    print("KERNEL_OK")
</pallas_src>

<mosaic_0001>
module attributes {stable_mosaic.version = 11 : i64} {
  func.func @_mlp_kernel_resident(%arg0: i32, %arg1: memref<16x128xbf16, #tpu.memory_space<vmem>>, %arg2: memref<128x512xbf16, #tpu.memory_space<vmem>>, %arg3: memref<1x512xf32, #tpu.memory_space<vmem>>, %arg4: memref<512x128xbf16, #tpu.memory_space<vmem>>, %arg5: memref<1x128xf32, #tpu.memory_space<vmem>>, %arg6: memref<16x128xf32, #tpu.memory_space<vmem>>) attributes {dimension_semantics = [#tpu.dimension_semantics<parallel>], iteration_bounds = array<i64: 1>, scalar_prefetch = 0 : i64, scratch_operands = 0 : i64, tpu.core_type = #tpu.core_type<tc>, window_params = [{transform_indices = @transform_0, window_bounds = array<i64: 16, 128>}, {pipeline_mode = #tpu.pipeline_mode<synchronous>, transform_indices = @transform_1, window_bounds = array<i64: 128, 512>}, {pipeline_mode = #tpu.pipeline_mode<synchronous>, transform_indices = @transform_2, window_bounds = array<i64: 1, 512>}, {pipeline_mode = #tpu.pipeline_mode<synchronous>, transform_indices = @transform_3, window_bounds = array<i64: 512, 128>}, {pipeline_mode = #tpu.pipeline_mode<synchronous>, transform_indices = @transform_4, window_bounds = array<i64: 1, 128>}, {transform_indices = @transform_5, window_bounds = array<i64: 16, 128>}]} {
    %c0 = arith.constant 0 : index
    %c0_0 = arith.constant 0 : index
    %0 = vector.load %arg1[%c0, %c0_0] : memref<16x128xbf16, #tpu.memory_space<vmem>>, vector<16x128xbf16>
    %c0_1 = arith.constant 0 : index
    %c0_2 = arith.constant 0 : index
    %1 = vector.load %arg2[%c0_1, %c0_2] : memref<128x512xbf16, #tpu.memory_space<vmem>>, vector<128x512xbf16>
    %cst = arith.constant dense<0.000000e+00> : vector<16x512xf32>
    %2 = tpu.matmul %0, %1, %cst {dimension_numbers = #tpu.dot_dimension_numbers<[1], [0], [0], [1], [0, 0, 1, 1], [], []>} : vector<16x128xbf16>, vector<128x512xbf16>, vector<16x512xf32> -> vector<16x512xf32>
    %c0_3 = arith.constant 0 : index
    %c0_4 = arith.constant 0 : index
    %3 = vector.load %arg3[%c0_3, %c0_4] : memref<1x512xf32, #tpu.memory_space<vmem>>, vector<1x512xf32>
    %4 = vector.broadcast %3 : vector<1x512xf32> to vector<16x512xf32>
    %5 = arith.addf %2, %4 : vector<16x512xf32>
    %cst_5 = arith.constant 5.000000e-01 : f32
    %6 = vector.broadcast %cst_5 : f32 to vector<16x512xf32>
    %7 = arith.mulf %6, %5 : vector<16x512xf32>
    %cst_6 = arith.constant 4.471500e-02 : f32
    %8 = vector.broadcast %cst_6 : f32 to vector<16x512xf32>
    %9 = arith.mulf %8, %5 : vector<16x512xf32>
    %10 = arith.mulf %9, %5 : vector<16x512xf32>
    %11 = arith.mulf %10, %5 : vector<16x512xf32>
    %12 = arith.addf %5, %11 : vector<16x512xf32>
    %cst_7 = arith.constant 0.797884583 : f32
    %13 = vector.broadcast %cst_7 : f32 to vector<16x512xf32>
    %14 = arith.mulf %13, %12 : vector<16x512xf32>
    %15 = math.tanh %14 : vector<16x512xf32>
    %cst_8 = arith.constant 1.000000e+00 : f32
    %16 = vector.broadcast %cst_8 : f32 to vector<16x512xf32>
    %17 = arith.addf %16, %15 : vector<16x512xf32>
    %18 = arith.mulf %7, %17 : vector<16x512xf32>
    %19 = arith.truncf %18 : vector<16x512xf32> to vector<16x512xbf16>
    %c0_9 = arith.constant 0 : index
    %c0_10 = arith.constant 0 : index
    %20 = vector.load %arg4[%c0_9, %c0_10] : memref<512x128xbf16, #tpu.memory_space<vmem>>, vector<512x128xbf16>
    %cst_11 = arith.constant dense<0.000000e+00> : vector<16x128xf32>
    %21 = tpu.matmul %19, %20, %cst_11 {dimension_numbers = #tpu.dot_dimension_numbers<[1], [0], [0], [1], [0, 0, 1, 1], [], []>} : vector<16x512xbf16>, vector<512x128xbf16>, vector<16x128xf32> -> vector<16x128xf32>
    %c0_12 = arith.constant 0 : index
    %c0_13 = arith.constant 0 : index
    %22 = vector.load %arg5[%c0_12, %c0_13] : memref<1x128xf32, #tpu.memory_space<vmem>>, vector<1x128xf32>
    %23 = vector.broadcast %22 : vector<1x128xf32> to vector<16x128xf32>
    %24 = arith.addf %21, %23 : vector<16x128xf32>
    %c0_14 = arith.constant 0 : index
    %c0_15 = arith.constant 0 : index
    %25 = vector.load %arg6[%c0_14, %c0_15] : memref<16x128xf32, #tpu.memory_space<vmem>>, vector<16x128xf32>
    tpu.vector_store %arg6[%c0_14, %c0_15], %24 {strides = array<i32>} : memref<16x128xf32, #tpu.memory_space<vmem>>, vector<16x128xf32>,
    return
  }
  func.func @transform_0(%arg0: i32) -> (i32, i32) {
    %c0_i32 = arith.constant 0 : i32
    %c0_i32_0 = arith.constant 0 : i32
    return %arg0, %c0_i32 : i32, i32
  }
  func.func @transform_1(%arg0: i32) -> (i32, i32) {
    %c0_i32 = arith.constant 0 : i32
    %c0_i32_0 = arith.constant 0 : i32
    %c0_i32_1 = arith.constant 0 : i32
    return %c0_i32, %c0_i32_0 : i32, i32
  }
  func.func @transform_2(%arg0: i32) -> (i32, i32) {
    %c0_i32 = arith.constant 0 : i32
    %c0_i32_0 = arith.constant 0 : i32
    %c0_i32_1 = arith.constant 0 : i32
    return %c0_i32, %c0_i32_0 : i32, i32
  }
  func.func @transform_3(%arg0: i32) -> (i32, i32) {
    %c0_i32 = arith.constant 0 : i32
    %c0_i32_0 = arith.constant 0 : i32
    %c0_i32_1 = arith.constant 0 : i32
    return %c0_i32, %c0_i32_0 : i32, i32
  }
  func.func @transform_4(%arg0: i32) -> (i32, i32) {
    %c0_i32 = arith.constant 0 : i32
    %c0_i32_0 = arith.constant 0 : i32
    %c0_i32_1 = arith.constant 0 : i32
    return %c0_i32, %c0_i32_0 : i32, i32
  }
  func.func @transform_5(%arg0: i32) -> (i32, i32) {
    %c0_i32 = arith.constant 0 : i32
    %c0_i32_0 = arith.constant 0 : i32
    return %arg0, %c0_i32 : i32, i32
  }
}

</mosaic_0001>

<llo_original>
// kernel: tpu_custom_call.1
$region0: #{tpu_custom_call.1}
  #allocation0 [shape = 'u32[]', space=smem, size = 0x4, offset = 0x4, fixed_abs, tag = 'smem constant byte address 0x4 - core index']
  #allocation1 [shape = 'u32[144,128]{1,0:T(1,128)}', space=vmem, size = 0x12000, scoped, tag = 'internal scratch']
  %s0 = inlined_call_operand.hbm [shape: bf16[16,128], index: 0, kind: input, shape index: {}]
  %s1 = inlined_call_operand.hbm [shape: bf16[128,512], index: 1, kind: input, shape index: {}]
  %s2 = inlined_call_operand.vmem [shape: f32[1,512], index: 2, kind: input, shape index: {}]
  %s3 = inlined_call_operand.hbm [shape: bf16[512,128], index: 3, kind: input, shape index: {}]
  %s4 = inlined_call_operand.vmem [shape: f32[1,128], index: 4, kind: input, shape index: {}]
  %s5 = inlined_call_operand.hbm [shape: f32[16,128], index: 5, kind: output, shape index: {}]
  %s6 = sld [smem:[#allocation0]]
  $region42: #{tpu_custom_call.1} parent=0
    _
  %s8 = ssub.s32 1, %s6
  %s9 = scalar_select 0, %s8, %s6
  $region1: #{tpu_custom_call.1} parent=0
    #allocation2 [shape = 'u8[4096]{0}', space=vmem, size = 0x1000, scoped, tag = 'input window, operand 0, single buffered']
    #allocation3 [shape = 's32[1]{0}', space=sflag, size = 0x4, scoped, tag = 'scoped memory for tpu_custom_call.1']
    #allocation4 [shape = 's32[1]{0}', space=sflag, size = 0x4, scoped, tag = 'scoped memory for tpu_custom_call.1']
    #allocation5 [shape = 'u8[131072]{0}', space=vmem, size = 0x20000, scoped, tag = 'input window, operand 1, single buffered']
    #allocation6 [shape = 's32[1]{0}', space=sflag, size = 0x4, scoped, tag = 'scoped memory for tpu_custom_call.1']
    #allocation7 [shape = 'u8[131072]{0}', space=vmem, size = 0x20000, scoped, tag = 'input window, operand 3, single buffered']
    #allocation8 [shape = 'u8[8192]{0}', space=vmem, size = 0x2000, scoped, tag = 'output window, operand 0, single buffered']
    %10 = vsyncpa [#allocation3], 0
    %11 = vsyncpa [#allocation6], 0
    %12 = vsyncpa [#allocation4], 0
    // Predicated region
    $region2: #{tpu_custom_call.1} parent=1 // pred_check
      _
    $region3: #{tpu_custom_call.1} parent=1 // pred_check_branch
      %14 = sbr.rel (0) target = $region5
    $region4: #{tpu_custom_call.1} parent=1 // pred_region
      %s16 = ssub.s32 128, 128
      %17 = vsyncadd [#allocation3], %s16
      %s18 = sshll.u32 [#allocation2], 4
      %s19 = int_to_ptr.vmem [resolvable:$true] %s18
      %24 = dma.hbm_to_vmem [thread:$0]  %s0, 128, %s19, [#allocation3], 64, 64, 4
    $region5: #{tpu_custom_call.1} parent=1 // pred_fallthru
      _
    // Predicated region
    $region6: #{tpu_custom_call.1} parent=1 // pred_check
      _
    $region7: #{tpu_custom_call.1} parent=1 // pred_check_branch
      %26 = sbr.rel (0) target = $region9
    $region8: #{tpu_custom_call.1} parent=1 // pred_region
      %s28 = ssub.s32 4096, 4096
      %29 = vsyncadd [#allocation6], %s28
      %s30 = sshll.u32 [#allocation5], 4
      %s31 = int_to_ptr.vmem [resolvable:$true] %s30
      %36 = dma.hbm_to_vmem [thread:$0]  %s1, 4096, %s31, [#allocation6], 256, 256, 16
    $region9: #{tpu_custom_call.1} parent=1 // pred_fallthru
      _
    // Predicated region
    $region10: #{tpu_custom_call.1} parent=1 // pred_check
      _
    $region11: #{tpu_custom_call.1} parent=1 // pred_check_branch
      %38 = sbr.rel (0) target = $region13
    $region12: #{tpu_custom_call.1} parent=1 // pred_region
      _
    $region13: #{tpu_custom_call.1} parent=1 // pred_fallthru
      _
    // Predicated region
    $region14: #{tpu_custom_call.1} parent=1 // pred_check
      _
    $region15: #{tpu_custom_call.1} parent=1 // pred_check_branch
      %40 = sbr.rel (0) target = $region17
    $region16: #{tpu_custom_call.1} parent=1 // pred_region
      %s42 = ssub.s32 4096, 4096
      %43 = vsyncadd [#allocation6], %s42
      %s44 = sshll.u32 [#allocation7], 4
      %s45 = int_to_ptr.vmem [resolvable:$true] %s44
      %50 = dma.hbm_to_vmem [thread:$0]  %s3, 4096, %s45, [#allocation6], 64, 64, 4
    $region17: #{tpu_custom_call.1} parent=1 // pred_fallthru
      _
    // Predicated region
    $region18: #{tpu_custom_call.1} parent=1 // pred_check
      _
    $region19: #{tpu_custom_call.1} parent=1 // pred_check_branch
      %52 = sbr.rel (0) target = $region21
    $region20: #{tpu_custom_call.1} parent=1 // pred_region
      _
    $region21: #{tpu_custom_call.1} parent=1 // pred_fallthru
      _
    // Predicated region
    $region22: #{tpu_custom_call.1} parent=1 // pred_check
      _
    $region23: #{tpu_custom_call.1} parent=1 // pred_check_branch
      %54 = sbr.rel (0) target = $region25
    $region24: #{tpu_custom_call.1} parent=1 // pred_region
      %55 = dma.done [#allocation3], 128
    $region25: #{tpu_custom_call.1} parent=1 // pred_fallthru
      _
    // Predicated region
    $region26: #{tpu_custom_call.1} parent=1 // pred_check
      _
    $region27: #{tpu_custom_call.1} parent=1 // pred_check_branch
      %57 = sbr.rel (0) target = $region29
    $region28: #{tpu_custom_call.1} parent=1 // pred_region
      %58 = dma.done [#allocation6], 4096
    $region29: #{tpu_custom_call.1} parent=1 // pred_fallthru
      _
    // Predicated region
    $region30: #{tpu_custom_call.1} parent=1 // pred_check
      _
    $region31: #{tpu_custom_call.1} parent=1 // pred_check_branch
      %60 = sbr.rel (0) target = $region33
    $region32: #{tpu_custom_call.1} parent=1 // pred_region
      %61 = dma.done [#allocation6], 4096
    $region33: #{tpu_custom_call.1} parent=1 // pred_fallthru
      _
    %v63 = vld [vmem:[#allocation2] sm:$0xf]
    %v64 = vld [vmem:[#allocation2 + $0x4] sm:$0xf]
    %v65 = vld [vmem:[#allocation5] sm:$0xff]
    %v66 = vld [vmem:[#allocation5 + $0x8] sm:$0xff]
    %v67 = vld [vmem:[#allocation5 + $0x10] sm:$0xff]
    %v68 = vld [vmem:[#allocation5 + $0x18] sm:$0xff]
    %v69 = vld [vmem:[#allocation5 + $0x20] sm:$0xff]
    %v70 = vld [vmem:[#allocation5 + $0x28] sm:$0xff]
    %v71 = vld [vmem:[#allocation5 + $0x30] sm:$0xff]
    %v72 = vld [vmem:[#allocation5 + $0x38] sm:$0xff]
    %v73 = vld [vmem:[#allocation5 + $0x40] sm:$0xff]
    %v74 = vld [vmem:[#allocation5 + $0x48] sm:$0xff]
    %v75 = vld [vmem:[#allocation5 + $0x50] sm:$0xff]
    %v76 = vld [vmem:[#allocation5 + $0x58] sm:$0xff]
    %v77 = vld [vmem:[#allocation5 + $0x60] sm:$0xff]
    %v78 = vld [vmem:[#allocation5 + $0x68] sm:$0xff]
    %v79 = vld [vmem:[#allocation5 + $0x70] sm:$0xff]
    %v80 = vld [vmem:[#allocation5 + $0x78] sm:$0xff]
    %v81 = vld [vmem:[#allocation5 + $0x80] sm:$0xff]
    %v82 = vld [vmem:[#allocation5 + $0x88] sm:$0xff]
    %v83 = vld [vmem:[#allocation5 + $0x90] sm:$0xff]
    %v84 = vld [vmem:[#allocation5 + $0x98] sm:$0xff]
    %v85 = vld [vmem:[#allocation5 + $0xa0] sm:$0xff]
    %v86 = vld [vmem:[#allocation5 + $0xa8] sm:$0xff]
    %v87 = vld [vmem:[#allocation5 + $0xb0] sm:$0xff]
    %v88 = vld [vmem:[#allocation5 + $0xb8] sm:$0xff]
    %v89 = vld [vmem:[#allocation5 + $0xc0] sm:$0xff]
    %v90 = vld [vmem:[#allocation5 + $0xc8] sm:$0xff]
    %v91 = vld [vmem:[#allocation5 + $0xd0] sm:$0xff]
    %v92 = vld [vmem:[#allocation5 + $0xd8] sm:$0xff]
    %v93 = vld [vmem:[#allocation5 + $0xe0] sm:$0xff]
    %v94 = vld [vmem:[#allocation5 + $0xe8] sm:$0xff]
    %v95 = vld [vmem:[#allocation5 + $0xf0] sm:$0xff]
    %v96 = vld [vmem:[#allocation5 + $0xf8] sm:$0xff]
    %v97 = vld [vmem:[%s2] sm:$0xf]
    %v99 = vlaneseq
    %v100 = vshrl.u32 %v99, 7
    %v101 = vsub.s32 0, %v100
    %v102 = vrot.slane %v97, %v101
    %v103 = vlaneseq
    %v104 = vshrl.u32 %v103, 7
    %v105 = vsub.s32 1, %v104
    %v106 = vrot.slane %v97, %v105
    %v107 = vlaneseq
    %v108 = vshrl.u32 %v107, 7
    %v109 = vsub.s32 2, %v108
    %v110 = vrot.slane %v97, %v109
    %v111 = vlaneseq
    %v112 = vshrl.u32 %v111, 7
    %v113 = vsub.s32 3, %v112
    %v114 = vrot.slane %v97, %v113
    %v121 = vunpack.c.l.b16 %v63
    %v122 = vunpack.c.l.b16 %v64
    %v123 = vpack.c.b16 %v122, %v121
    %v157 = vunpack.c.l.b16 %v65
    %v158 = vunpack.c.h.b16 %v65
    %v159 = vunpack.c.l.b16 %v66
    %v160 = vunpack.c.h.b16 %v66
    %v161 = vunpack.c.l.b16 %v67
    %v162 = vunpack.c.h.b16 %v67
    %v163 = vunpack.c.l.b16 %v68
    %v164 = vunpack.c.h.b16 %v68
    %v165 = vunpack.c.l.b16 %v69
    %v166 = vunpack.c.h.b16 %v69
    %v167 = vunpack.c.l.b16 %v70
    %v168 = vunpack.c.h.b16 %v70
    %v169 = vunpack.c.l.b16 %v71
    %v170 = vunpack.c.h.b16 %v71
    %v171 = vunpack.c.l.b16 %v72
    %v172 = vunpack.c.h.b16 %v72
    %v173 = vunpack.c.l.b16 %v73
    %v174 = vunpack.c.h.b16 %v73
    %v175 = vunpack.c.l.b16 %v74
    %v176 = vunpack.c.h.b16 %v74
    %v177 = vunpack.c.l.b16 %v75
    %v178 = vunpack.c.h.b16 %v75
    %v179 = vunpack.c.l.b16 %v76
    %v180 = vunpack.c.h.b16 %v76
    %v181 = vunpack.c.l.b16 %v77
    %v182 = vunpack.c.h.b16 %v77
    %v183 = vunpack.c.l.b16 %v78
    %v184 = vunpack.c.h.b16 %v78
    %v185 = vunpack.c.l.b16 %v79
    %v186 = vunpack.c.h.b16 %v79
    %v187 = vunpack.c.l.b16 %v80
    %v188 = vunpack.c.h.b16 %v80
    %v189 = vunpack.c.l.b16 %v81
    %v190 = vunpack.c.h.b16 %v81
    %v191 = vunpack.c.l.b16 %v82
    %v192 = vunpack.c.h.b16 %v82
    %v193 = vunpack.c.l.b16 %v83
    %v194 = vunpack.c.h.b16 %v83
    %v195 = vunpack.c.l.b16 %v84
    %v196 = vunpack.c.h.b16 %v84
    %v197 = vunpack.c.l.b16 %v85
    %v198 = vunpack.c.h.b16 %v85
    %v199 = vunpack.c.l.b16 %v86
    %v200 = vunpack.c.h.b16 %v86
    %v201 = vunpack.c.l.b16 %v87
    %v202 = vunpack.c.h.b16 %v87
    %v203 = vunpack.c.l.b16 %v88
    %v204 = vunpack.c.h.b16 %v88
    %v205 = vunpack.c.l.b16 %v89
    %v206 = vunpack.c.h.b16 %v89
    %v207 = vunpack.c.l.b16 %v90
    %v208 = vunpack.c.h.b16 %v90
    %v209 = vunpack.c.l.b16 %v91
    %v210 = vunpack.c.h.b16 %v91
    %v211 = vunpack.c.l.b16 %v92
    %v212 = vunpack.c.h.b16 %v92
    %v213 = vunpack.c.l.b16 %v93
    %v214 = vunpack.c.h.b16 %v93
    %v215 = vunpack.c.l.b16 %v94
    %v216 = vunpack.c.h.b16 %v94
    %v217 = vunpack.c.l.b16 %v95
    %v218 = vunpack.c.h.b16 %v95
    %v219 = vunpack.c.l.b16 %v96
    %v220 = vunpack.c.h.b16 %v96
    %v221 = vpack.c.b16 %v161, %v157
    %v222 = vpack.c.b16 %v162, %v158
    %v223 = vpack.c.b16 %v163, %v159
    %v224 = vpack.c.b16 %v164, %v160
    %v225 = vpack.c.b16 %v169, %v165
    %v226 = vpack.c.b16 %v170, %v166
    %v227 = vpack.c.b16 %v171, %v167
    %v228 = vpack.c.b16 %v172, %v168
    %v229 = vpack.c.b16 %v177, %v173
    %v230 = vpack.c.b16 %v178, %v174
    %v231 = vpack.c.b16 %v179, %v175
    %v232 = vpack.c.b16 %v180, %v176
    %v233 = vpack.c.b16 %v185, %v181
    %v234 = vpack.c.b16 %v186, %v182
    %v235 = vpack.c.b16 %v187, %v183
    %v236 = vpack.c.b16 %v188, %v184
    %v237 = vpack.c.b16 %v193, %v189
    %v238 = vpack.c.b16 %v194, %v190
    %v239 = vpack.c.b16 %v195, %v191
    %v240 = vpack.c.b16 %v196, %v192
    %v241 = vpack.c.b16 %v201, %v197
    %v242 = vpack.c.b16 %v202, %v198
    %v243 = vpack.c.b16 %v203, %v199
    %v244 = vpack.c.b16 %v204, %v200
    %v245 = vpack.c.b16 %v209, %v205
    %v246 = vpack.c.b16 %v210, %v206
    %v247 = vpack.c.b16 %v211, %v207
    %v248 = vpack.c.b16 %v212, %v208
    %v249 = vpack.c.b16 %v217, %v213
    %v250 = vpack.c.b16 %v218, %v214
    %v251 = vpack.c.b16 %v219, %v215
    %v252 = vpack.c.b16 %v220, %v216
    %285 = vmatprep.subr.bf16.mxu0 %v222
    %286 = vmatpush1.bf16.msra.mxu0 %v221
    %287 = vmatprep.subr.bf16.mxu0 %v226
    %288 = vmatpush1.bf16.msra.mxu0 %v225
    %289 = vmatprep.subr.bf16.mxu0 %v230
    %290 = vmatpush1.bf16.msra.mxu0 %v229
    %291 = vmatprep.subr.bf16.mxu0 %v234
    %292 = vmatpush1.bf16.msra.mxu0 %v233
    %293 = vmatprep.subr.bf16.mxu0 %v238
    %294 = vmatpush1.bf16.msra.mxu0 %v237
    %295 = vmatprep.subr.bf16.mxu0 %v242
    %296 = vmatpush1.bf16.msra.mxu0 %v241
    %297 = vmatprep.subr.bf16.mxu0 %v246
    %298 = vmatpush1.bf16.msra.mxu0 %v245
    %299 = vmatprep.subr.bf16.mxu0 %v250
    %300 = vmatpush1.bf16.msra.mxu0 %v249
    %301 = vmatprep.subr.bf16.mxu0 0
    %302 = vmatpush1.bf16.msra.mxu0 0
    %303 = vmatprep.subr.bf16.mxu0 0
    %304 = vmatpush1.bf16.msra.mxu0 0
    %305 = vmatprep.subr.bf16.mxu0 0
    %306 = vmatpush1.bf16.msra.mxu0 0
    %307 = vmatprep.subr.bf16.mxu0 0
    %308 = vmatpush1.bf16.msra.mxu0 0
    %309 = vmatprep.subr.bf16.mxu0 0
    %310 = vmatpush1.bf16.msra.mxu0 0
    %311 = vmatprep.subr.bf16.mxu0 0
    %312 = vmatpush1.bf16.msra.mxu0 0
    %313 = vmatprep.subr.bf16.mxu0 0
    %314 = vmatpush1.bf16.msra.mxu0 0
    %315 = vmatprep.subr.bf16.mxu0 0
    %316 = vmatpush1.bf16.msra.mxu0 0
    %317 = vmatprep.mubr.bf16.mxu0 0
    %318 = vmatmul.mubr.bf16.gmra.mrb[0].mxu0 %v123
    %v319 = vpop.f32.mrb[0].mxu0
    %v320 = vadd.f32 %v102, %v319
    %v321 = vpop.f32.mrb[0].mxu0
    %v322 = vadd.f32 %v106, %v321
    %v323 = vpop.f32.mrb[0].mxu0
    %v324 = vadd.f32 %v102, %v323
    %v325 = vpop.f32.mrb[0].mxu0
    %v326 = vadd.f32 %v106, %v325
    %327 = vdwg.mxu0
    %328 = vmatprep.subr.bf16.mxu0 %v224
    %329 = vmatpush1.bf16.msra.mxu0 %v223
    %330 = vmatprep.subr.bf16.mxu0 %v228
    %331 = vmatpush1.bf16.msra.mxu0 %v227
    %332 = vmatprep.subr.bf16.mxu0 %v232
    %333 = vmatpush1.bf16.msra.mxu0 %v231
    %334 = vmatprep.subr.bf16.mxu0 %v236
    %335 = vmatpush1.bf16.msra.mxu0 %v235
    %336 = vmatprep.subr.bf16.mxu0 %v240
    %337 = vmatpush1.bf16.msra.mxu0 %v239
    %338 = vmatprep.subr.bf16.mxu0 %v244
    %339 = vmatpush1.bf16.msra.mxu0 %v243
    %340 = vmatprep.subr.bf16.mxu0 %v248
    %341 = vmatpush1.bf16.msra.mxu0 %v247
    %342 = vmatprep.subr.bf16.mxu0 %v252
    %343 = vmatpush1.bf16.msra.mxu0 %v251
    %344 = vmatprep.subr.bf16.mxu0 0
    %345 = vmatpush1.bf16.msra.mxu0 0
    %346 = vmatprep.subr.bf16.mxu0 0
    %347 = vmatpush1.bf16.msra.mxu0 0
    %348 = vmatprep.subr.bf16.mxu0 0
    %349 = vmatpush1.bf16.msra.mxu0 0
    %350 = vmatprep.subr.bf16.mxu0 0
    %351 = vmatpush1.bf16.msra.mxu0 0
    %352 = vmatprep.subr.bf16.mxu0 0
    %353 = vmatpush1.bf16.msra.mxu0 0
    %354 = vmatprep.subr.bf16.mxu0 0
    %355 = vmatpush1.bf16.msra.mxu0 0
    %356 = vmatprep.subr.bf16.mxu0 0
    %357 = vmatpush1.bf16.msra.mxu0 0
    %358 = vmatprep.subr.bf16.mxu0 0
    %359 = vmatpush1.bf16.msra.mxu0 0
    %360 = vmatprep.mubr.bf16.mxu0 0
    %361 = vmatmul.mubr.bf16.gmra.mrb[0].mxu0 %v123
    %v362 = vpop.f32.mrb[0].mxu0
    %v363 = vadd.f32 %v110, %v362
    %v364 = vpop.f32.mrb[0].mxu0
    %v365 = vadd.f32 %v114, %v364
    %v366 = vpop.f32.mrb[0].mxu0
    %v367 = vadd.f32 %v110, %v366
    %v368 = vpop.f32.mrb[0].mxu0
    %v369 = vadd.f32 %v114, %v368
    %370 = vdwg.mxu0
    %v371 = vmul.f32 %v320, 0.5
    %v372 = vmul.f32 %v322, 0.5
    %v373 = vmul.f32 %v363, 0.5
    %v374 = vmul.f32 %v365, 0.5
    %v375 = vmul.f32 %v324, 0.5
    %v376 = vmul.f32 %v326, 0.5
    %v377 = vmul.f32 %v367, 0.5
    %v378 = vmul.f32 %v369, 0.5
    %v379 = vmul.f32 %v320, 0.044715
    %v380 = vmul.f32 %v322, 0.044715
    %v381 = vmul.f32 %v363, 0.044715
    %v382 = vmul.f32 %v365, 0.044715
    %v383 = vmul.f32 %v324, 0.044715
    %v384 = vmul.f32 %v326, 0.044715
    %v385 = vmul.f32 %v367, 0.044715
    %v386 = vmul.f32 %v369, 0.044715
    %v387 = vmul.f32 %v379, %v320
    %v388 = vmul.f32 %v380, %v322
    %v389 = vmul.f32 %v381, %v363
    %v390 = vmul.f32 %v382, %v365
    %v391 = vmul.f32 %v383, %v324
    %v392 = vmul.f32 %v384, %v326
    %v393 = vmul.f32 %v385, %v367
    %v394 = vmul.f32 %v386, %v369
    %v395 = vmul.f32 %v387, %v320
    %v396 = vmul.f32 %v388, %v322
    %v397 = vmul.f32 %v389, %v363
    %v398 = vmul.f32 %v390, %v365
    %v399 = vmul.f32 %v391, %v324
    %v400 = vmul.f32 %v392, %v326
    %v401 = vmul.f32 %v393, %v367
    %v402 = vmul.f32 %v394, %v369
    %v403 = vadd.f32 %v320, %v395
    %v404 = vadd.f32 %v322, %v396
    %v405 = vadd.f32 %v363, %v397
    %v406 = vadd.f32 %v365, %v398
    %v407 = vadd.f32 %v324, %v399
    %v408 = vadd.f32 %v326, %v400
    %v409 = vadd.f32 %v367, %v401
    %v410 = vadd.f32 %v369, %v402
    %v411 = vmul.f32 %v403, 0.7978846
    %v412 = vmul.f32 %v404, 0.7978846
    %v413 = vmul.f32 %v405, 0.7978846
    %v414 = vmul.f32 %v406, 0.7978846
    %v415 = vmul.f32 %v407, 0.7978846
    %v416 = vmul.f32 %v408, 0.7978846
    %v417 = vmul.f32 %v409, 0.7978846
    %v418 = vmul.f32 %v410, 0.7978846
    %v419 = vtanh.pop %v411
    %v420 = vtanh.pop %v412
    %v421 = vtanh.pop %v413
    %v422 = vtanh.pop %v414
    %v423 = vtanh.pop %v415
    %v424 = vtanh.pop %v416
    %v425 = vtanh.pop %v417
    %v426 = vtanh.pop %v418
    %v427 = vadd.f32 %v419, 1.0
    %v428 = vadd.f32 %v420, 1.0
    %v429 = vadd.f32 %v421, 1.0
    %v430 = vadd.f32 %v422, 1.0
    %v431 = vadd.f32 %v423, 1.0
    %v432 = vadd.f32 %v424, 1.0
    %v433 = vadd.f32 %v425, 1.0
    %v434 = vadd.f32 %v426, 1.0
    %v435 = vmul.f32 %v371, %v427
    %v436 = vmul.f32 %v372, %v428
    %v437 = vmul.f32 %v373, %v429
    %v438 = vmul.f32 %v374, %v430
    %v439 = vmul.f32 %v375, %v431
    %v440 = vmul.f32 %v376, %v432
    %v441 = vmul.f32 %v377, %v433
    %v442 = vmul.f32 %v378, %v434
    %v443 = vpack.c.bf16 %v439, %v435
    %v444 = vpack.c.bf16 %v440, %v436
    %v445 = vpack.c.bf16 %v441, %v437
    %v446 = vpack.c.bf16 %v442, %v438
    %v447 = vld [vmem:[#allocation7] sm:$0xf]
    %v448 = vld [vmem:[#allocation7 + $0x4] sm:$0xf]
    %v449 = vld [vmem:[#allocation7 + $0x8] sm:$0xf]
    %v450 = vld [vmem:[#allocation7 + $0xc] sm:$0xf]
    %v451 = vld [vmem:[#allocation7 + $0x10] sm:$0xf]
    %v452 = vld [vmem:[#allocation7 + $0x14] sm:$0xf]
    %v453 = vld [vmem:[#allocation7 + $0x18] sm:$0xf]
    %v454 = vld [vmem:[#allocation7 + $0x1c] sm:$0xf]
    %v455 = vld [vmem:[#allocation7 + $0x20] sm:$0xf]
    %v456 = vld [vmem:[#allocation7 + $0x24] sm:$0xf]
    %v457 = vld [vmem:[#allocation7 + $0x28] sm:$0xf]
    %v458 = vld [vmem:[#allocation7 + $0x2c] sm:$0xf]
    %v459 = vld [vmem:[#allocation7 + $0x30] sm:$0xf]
    %v460 = vld [vmem:[#allocation7 + $0x34] sm:$0xf]
    %v461 = vld [vmem:[#allocation7 + $0x38] sm:$0xf]
    %v462 = vld [vmem:[#allocation7 + $0x3c] sm:$0xf]
    %v463 = vld [vmem:[#allocation7 + $0x40] sm:$0xf]
    %v464 = vld [vmem:[#allocation7 + $0x44] sm:$0xf]
    %v465 = vld [vmem:[#allocation7 + $0x48] sm:$0xf]
    %v466 = vld [vmem:[#allocation7 + $0x4c] sm:$0xf]
    %v467 = vld [vmem:[#allocation7 + $0x50] sm:$0xf]
    %v468 = vld [vmem:[#allocation7 + $0x54] sm:$0xf]
    %v469 = vld [vmem:[#allocation7 + $0x58] sm:$0xf]
    %v470 = vld [vmem:[#allocation7 + $0x5c] sm:$0xf]
    %v471 = vld [vmem:[#allocation7 + $0x60] sm:$0xf]
    %v472 = vld [vmem:[#allocation7 + $0x64] sm:$0xf]
    %v473 = vld [vmem:[#allocation7 + $0x68] sm:$0xf]
    %v474 = vld [vmem:[#allocation7 + $0x6c] sm:$0xf]
    %v475 = vld [vmem:[#allocation7 + $0x70] sm:$0xf]
    %v476 = vld [vmem:[#allocation7 + $0x74] sm:$0xf]
    %v477 = vld [vmem:[#allocation7 + $0x78] sm:$0xf]
    %v478 = vld [vmem:[#allocation7 + $0x7c] sm:$0xf]
    %v479 = vld [vmem:[#allocation7 + $0x80] sm:$0xf]
    %v480 = vld [vmem:[#allocation7 + $0x84] sm:$0xf]
    %v481 = vld [vmem:[#allocation7 + $0x88] sm:$0xf]
    %v482 = vld [vmem:[#allocation7 + $0x8c] sm:$0xf]
    %v483 = vld [vmem:[#allocation7 + $0x90] sm:$0xf]
    %v484 = vld [vmem:[#allocation7 + $0x94] sm:$0xf]
    %v485 = vld [vmem:[#allocation7 + $0x98] sm:$0xf]
    %v486 = vld [vmem:[#allocation7 + $0x9c] sm:$0xf]
    %v487 = vld [vmem:[#allocation7 + $0xa0] sm:$0xf]
    %v488 = vld [vmem:[#allocation7 + $0xa4] sm:$0xf]
    %v489 = vld [vmem:[#allocation7 + $0xa8] sm:$0xf]
    %v490 = vld [vmem:[#allocation7 + $0xac] sm:$0xf]
    %v491 = vld [vmem:[#allocation7 + $0xb0] sm:$0xf]
    %v492 = vld [vmem:[#allocation7 + $0xb4] sm:$0xf]
    %v493 = vld [vmem:[#allocation7 + $0xb8] sm:$0xf]
    %v494 = vld [vmem:[#allocation7 + $0xbc] sm:$0xf]
    %v495 = vld [vmem:[#allocation7 + $0xc0] sm:$0xf]
    %v496 = vld [vmem:[#allocation7 + $0xc4] sm:$0xf]
    %v497 = vld [vmem:[#allocation7 + $0xc8] sm:$0xf]
    %v498 = vld [vmem:[#allocation7 + $0xcc] sm:$0xf]
    %v499 = vld [vmem:[#allocation7 + $0xd0] sm:$0xf]
    %v500 = vld [vmem:[#allocation7 + $0xd4] sm:$0xf]
    %v501 = vld [vmem:[#allocation7 + $0xd8] sm:$0xf]
    %v502 = vld [vmem:[#allocation7 + $0xdc] sm:$0xf]
    %v503 = vld [vmem:[#allocation7 + $0xe0] sm:$0xf]
    %v504 = vld [vmem:[#allocation7 + $0xe4] sm:$0xf]
    %v505 = vld [vmem:[#allocation7 + $0xe8] sm:$0xf]
    %v506 = vld [vmem:[#allocation7 + $0xec] sm:$0xf]
    %v507 = vld [vmem:[#allocation7 + $0xf0] sm:$0xf]
    %v508 = vld [vmem:[#allocation7 + $0xf4] sm:$0xf]
    %v509 = vld [vmem:[#allocation7 + $0xf8] sm:$0xf]
    %v510 = vld [vmem:[#allocation7 + $0xfc] sm:$0xf]
    %v511 = vld [vmem:[%s4] sm:$0x1]
    %v513 = vlaneseq
    %v514 = vshrl.u32 %v513, 7
    %v515 = vsub.s32 0, %v514
    %v516 = vrot.slane %v511, %v515
    %v582 = vunpack.c.l.b16 %v447
    %v583 = vunpack.c.l.b16 %v448
    %v584 = vunpack.c.l.b16 %v449
    %v585 = vunpack.c.l.b16 %v450
    %v586 = vunpack.c.l.b16 %v451
    %v587 = vunpack.c.l.b16 %v452
    %v588 = vunpack.c.l.b16 %v453
    %v589 = vunpack.c.l.b16 %v454
    %v590 = vunpack.c.l.b16 %v455
    %v591 = vunpack.c.l.b16 %v456
    %v592 = vunpack.c.l.b16 %v457
    %v593 = vunpack.c.l.b16 %v458
    %v594 = vunpack.c.l.b16 %v459
    %v595 = vunpack.c.l.b16 %v460
    %v596 = vunpack.c.l.b16 %v461
    %v597 = vunpack.c.l.b16 %v462
    %v598 = vunpack.c.l.b16 %v463
    %v599 = vunpack.c.l.b16 %v464
    %v600 = vunpack.c.l.b16 %v465
    %v601 = vunpack.c.l.b16 %v466
    %v602 = vunpack.c.l.b16 %v467
    %v603 = vunpack.c.l.b16 %v468
    %v604 = vunpack.c.l.b16 %v469
    %v605 = vunpack.c.l.b16 %v470
    %v606 = vunpack.c.l.b16 %v471
    %v607 = vunpack.c.l.b16 %v472
    %v608 = vunpack.c.l.b16 %v473
    %v609 = vunpack.c.l.b16 %v474
    %v610 = vunpack.c.l.b16 %v475
    %v611 = vunpack.c.l.b16 %v476
    %v612 = vunpack.c.l.b16 %v477
    %v613 = vunpack.c.l.b16 %v478
    %v614 = vunpack.c.l.b16 %v479
    %v615 = vunpack.c.l.b16 %v480
    %v616 = vunpack.c.l.b16 %v481
    %v617 = vunpack.c.l.b16 %v482
    %v618 = vunpack.c.l.b16 %v483
    %v619 = vunpack.c.l.b16 %v484
    %v620 = vunpack.c.l.b16 %v485
    %v621 = vunpack.c.l.b16 %v486
    %v622 = vunpack.c.l.b16 %v487
    %v623 = vunpack.c.l.b16 %v488
    %v624 = vunpack.c.l.b16 %v489
    %v625 = vunpack.c.l.b16 %v490
    %v626 = vunpack.c.l.b16 %v491
    %v627 = vunpack.c.l.b16 %v492
    %v628 = vunpack.c.l.b16 %v493
    %v629 = vunpack.c.l.b16 %v494
    %v630 = vunpack.c.l.b16 %v495
    %v631 = vunpack.c.l.b16 %v496
    %v632 = vunpack.c.l.b16 %v497
    %v633 = vunpack.c.l.b16 %v498
    %v634 = vunpack.c.l.b16 %v499
    %v635 = vunpack.c.l.b16 %v500
    %v636 = vunpack.c.l.b16 %v501
    %v637 = vunpack.c.l.b16 %v502
    %v638 = vunpack.c.l.b16 %v503
    %v639 = vunpack.c.l.b16 %v504
    %v640 = vunpack.c.l.b16 %v505
    %v641 = vunpack.c.l.b16 %v506
    %v642 = vunpack.c.l.b16 %v507
    %v643 = vunpack.c.l.b16 %v508
    %v644 = vunpack.c.l.b16 %v509
    %v645 = vunpack.c.l.b16 %v510
    %v646 = vpack.c.b16 %v583, %v582
    %v647 = vpack.c.b16 %v585, %v584
    %v648 = vpack.c.b16 %v587, %v586
    %v649 = vpack.c.b16 %v589, %v588
    %v650 = vpack.c.b16 %v591, %v590
    %v651 = vpack.c.b16 %v593, %v592
    %v652 = vpack.c.b16 %v595, %v594
    %v653 = vpack.c.b16 %v597, %v596
    %v654 = vpack.c.b16 %v599, %v598
    %v655 = vpack.c.b16 %v601, %v600
    %v656 = vpack.c.b16 %v603, %v602
    %v657 = vpack.c.b16 %v605, %v604
    %v658 = vpack.c.b16 %v607, %v606
    %v659 = vpack.c.b16 %v609, %v608
    %v660 = vpack.c.b16 %v611, %v610
    %v661 = vpack.c.b16 %v613, %v612
    %v662 = vpack.c.b16 %v615, %v614
    %v663 = vpack.c.b16 %v617, %v616
    %v664 = vpack.c.b16 %v619, %v618
    %v665 = vpack.c.b16 %v621, %v620
    %v666 = vpack.c.b16 %v623, %v622
    %v667 = vpack.c.b16 %v625, %v624
    %v668 = vpack.c.b16 %v627, %v626
    %v669 = vpack.c.b16 %v629, %v628
    %v670 = vpack.c.b16 %v631, %v630
    %v671 = vpack.c.b16 %v633, %v632
    %v672 = vpack.c.b16 %v635, %v634
    %v673 = vpack.c.b16 %v637, %v636
    %v674 = vpack.c.b16 %v639, %v638
    %v675 = vpack.c.b16 %v641, %v640
    %v676 = vpack.c.b16 %v643, %v642
    %v677 = vpack.c.b16 %v645, %v644
    %710 = vmatprep.subr.bf16.mxu0 0
    %711 = vmatpush1.bf16.msra.mxu0 %v646
    %712 = vmatprep.subr.bf16.mxu0 0
    %713 = vmatpush1.bf16.msra.mxu0 %v647
    %714 = vmatprep.subr.bf16.mxu0 0
    %715 = vmatpush1.bf16.msra.mxu0 %v648
    %716 = vmatprep.subr.bf16.mxu0 0
    %717 = vmatpush1.bf16.msra.mxu0 %v649
    %718 = vmatprep.subr.bf16.mxu0 0
    %719 = vmatpush1.bf16.msra.mxu0 %v650
    %720 = vmatprep.subr.bf16.mxu0 0
    %721 = vmatpush1.bf16.msra.mxu0 %v651
    %722 = vmatprep.subr.bf16.mxu0 0
    %723 = vmatpush1.bf16.msra.mxu0 %v652
    %724 = vmatprep.subr.bf16.mxu0 0
    %725 = vmatpush1.bf16.msra.mxu0 %v653
    %726 = vmatprep.subr.bf16.mxu0 0
    %727 = vmatpush1.bf16.msra.mxu0 %v654
    %728 = vmatprep.subr.bf16.mxu0 0
    %729 = vmatpush1.bf16.msra.mxu0 %v655
    %730 = vmatprep.subr.bf16.mxu0 0
    %731 = vmatpush1.bf16.msra.mxu0 %v656
    %732 = vmatprep.subr.bf16.mxu0 0
    %733 = vmatpush1.bf16.msra.mxu0 %v657
    %734 = vmatprep.subr.bf16.mxu0 0
    %735 = vmatpush1.bf16.msra.mxu0 %v658
    %736 = vmatprep.subr.bf16.mxu0 0
    %737 = vmatpush1.bf16.msra.mxu0 %v659
    %738 = vmatprep.subr.bf16.mxu0 0
    %739 = vmatpush1.bf16.msra.mxu0 %v660
    %740 = vmatprep.subr.bf16.mxu0 0
    %741 = vmatpush1.bf16.msra.mxu0 %v661
    %742 = vmatprep.mubr.bf16.mxu0 %v444
    %743 = vmatmul.mubr.bf16.gmra.mrb[0].mxu0 %v443
    %v744 = vpop.f32.mrb[0].mxu0
    %v745 = vadd.f32 %v516, %v744
    %v746 = vpop.f32.mrb[0].mxu0
    %v747 = vpop.f32.mrb[0].mxu0
    %v748 = vadd.f32 %v516, %v747
    %v749 = vpop.f32.mrb[0].mxu0
    %750 = vdwg.mxu0
    %751 = vmatprep.subr.bf16.mxu0 0
    %752 = vmatpush1.bf16.msra.mxu0 %v662
    %753 = vmatprep.subr.bf16.mxu0 0
    %754 = vmatpush1.bf16.msra.mxu0 %v663
    %755 = vmatprep.subr.bf16.mxu0 0
    %756 = vmatpush1.bf16.msra.mxu0 %v664
    %757 = vmatprep.subr.bf16.mxu0 0
    %758 = vmatpush1.bf16.msra.mxu0 %v665
    %759 = vmatprep.subr.bf16.mxu0 0
    %760 = vmatpush1.bf16.msra.mxu0 %v666
    %761 = vmatprep.subr.bf16.mxu0 0
    %762 = vmatpush1.bf16.msra.mxu0 %v667
    %763 = vmatprep.subr.bf16.mxu0 0
    %764 = vmatpush1.bf16.msra.mxu0 %v668
    %765 = vmatprep.subr.bf16.mxu0 0
    %766 = vmatpush1.bf16.msra.mxu0 %v669
    %767 = vmatprep.subr.bf16.mxu0 0
    %768 = vmatpush1.bf16.msra.mxu0 %v670
    %769 = vmatprep.subr.bf16.mxu0 0
    %770 = vmatpush1.bf16.msra.mxu0 %v671
    %771 = vmatprep.subr.bf16.mxu0 0
    %772 = vmatpush1.bf16.msra.mxu0 %v672
    %773 = vmatprep.subr.bf16.mxu0 0
    %774 = vmatpush1.bf16.msra.mxu0 %v673
    %775 = vmatprep.subr.bf16.mxu0 0
    %776 = vmatpush1.bf16.msra.mxu0 %v674
    %777 = vmatprep.subr.bf16.mxu0 0
    %778 = vmatpush1.bf16.msra.mxu0 %v675
    %779 = vmatprep.subr.bf16.mxu0 0
    %780 = vmatpush1.bf16.msra.mxu0 %v676
    %781 = vmatprep.subr.bf16.mxu0 0
    %782 = vmatpush1.bf16.msra.mxu0 %v677
    %783 = vmatprep.mubr.bf16.mxu0 %v446
    %784 = vmatmul.mubr.bf16.gmra.mrb[0].mxu0 %v445
    %v785 = vpop.f32.mrb[0].mxu0
    %v786 = vadd.f32 %v745, %v785
    %v787 = vpop.f32.mrb[0].mxu0
    %v788 = vpop.f32.mrb[0].mxu0
    %v789 = vadd.f32 %v748, %v788
    %v790 = vpop.f32.mrb[0].mxu0
    %791 = vdwg.mxu0
    %792 = vst [vmem:[#allocation8] sm:$0xff] %v786
    %793 = vst [vmem:[#allocation8 + $0x8] sm:$0xff] %v789
    // Predicated region
    $region34: #{tpu_custom_call.1} parent=1 // pred_check
      _
    $region35: #{tpu_custom_call.1} parent=1 // pred_check_branch
      %795 = sbr.rel (0) target = $region37
    $region36: #{tpu_custom_call.1} parent=1 // pred_region
      %s797 = ssub.s32 256, 256
      %798 = vsyncadd [#allocation4], %s797
      %s799 = sshll.u32 [#allocation8], 4
      %s800 = int_to_ptr.vmem [resolvable:$true] %s799
      %805 = dma.vmem_to_hbm [thread:$0]  %s800, 256, %s5, [#allocation4], 128, 128, 8
    $region37: #{tpu_custom_call.1} parent=1 // pred_fallthru
      _
    // Predicated region
    $region38: #{tpu_custom_call.1} parent=1 // pred_check
      _
    $region39: #{tpu_custom_call.1} parent=1 // pred_check_branch
      %807 = sbr.rel (0) target = $region41
    $region40: #{tpu_custom_call.1} parent=1 // pred_region
      %808 = dma.done [#allocation4], 256
    $region41: #{tpu_custom_call.1} parent=1 // pred_fallthru
      _
    %809 = vsyncpa [#allocation3], 1
    %810 = vsyncpa [#allocation6], 1
    %811 = vsyncpa [#allocation4], 1

</llo_original>
